<compile_context>
chip_gen: v6e
topology: v6e:2x2x1
jax: 0.10.0
libtpu: 0.0.40
codegen_flags: <defaults>
</compile_context>

<pallas_src>
import functools
import math

import jax
import jax.numpy as jnp
import numpy as np
from jax.experimental import pallas as pl
from jax.experimental.pallas import tpu as pltpu


def _mixq_bits_kernel(x_ref, o_ref, *, dim1, b1, b2):
    """Round -> uint8 wrap -> bit extraction, written plane-major per half.

    x_ref : (TB, dim) float tile.
    o_ref : (TB, dim1*b1 + dim2*b2) tile, column layout
            [half1 plane 0 | ... | half1 plane b1-1 | half2 plane 0 | ...],
            where plane j of a half holds bit (B-1-j) (MSB first).
    """
    dim = x_ref.shape[1]
    dim2 = dim - dim1

    def emit(xpart, nbits, col_off, width):
        if width == 0 or nbits == 0:
            return
        # torch.round (half-to-even) then .type(torch.uint8); the wrap is
        # emulated with & 0xFF (exact for the non-negative inputs this layer
        # is used with).
        vi = jnp.round(xpart).astype(jnp.int32) & 0xFF
        for j in range(nbits):                       # static unroll over planes
            shift = nbits - 1 - j                    # MSB first
            bit = (vi >> shift) & 1                  # shift + and: single-slot VPU ops
            o_ref[:, col_off + j * width: col_off + (j + 1) * width] = (
                bit.astype(o_ref.dtype))

    emit(x_ref[:, :dim1], b1, 0, dim1)               # static ref views: zero-cost
    emit(x_ref[:, dim1:], b2, b1 * dim1, dim2)


def _bit_permutation(dim1, dim2, b1, b2):
    """Column permutation: plane-major kernel layout -> torch channel-major layout."""
    p1 = (np.arange(b1)[None, :] * dim1 + np.arange(dim1)[:, None]).reshape(-1)
    p2 = (np.arange(b2)[None, :] * dim2 + np.arange(dim2)[:, None]).reshape(-1)
    return np.concatenate([p1, b1 * dim1 + p2]).astype(np.int32)


def mix_quantization_forward(x, *, dim1, b1, b2, out_dtype=jnp.float32,
                             max_rows_per_tile=1024, interleave_bits=True):
    """x: (batch, dim) float32 -> (batch, dim1*b1 + (dim-dim1)*b2) out_dtype."""
    batch, dim = x.shape
    dim2 = dim - dim1
    out_dim = dim1 * b1 + dim2 * b2
    out_itemsize = jnp.dtype(out_dtype).itemsize
    row_bytes = dim * x.dtype.itemsize + out_dim * out_itemsize

    # Batch tile sized so 2x (double-buffered) (input + output) tiles stay a
    # few MiB -- comfortably inside every generation's scoped-VMEM default.
    vmem_budget = 8 * 2**20
    tb = vmem_budget // (2 * row_bytes)
    tb = int(max(8, min(tb, max_rows_per_tile)))
    if tb >= batch:
        tb = batch                                  # single full-batch tile
        padded_batch = batch
        x_padded = x
    else:
        tb = (tb // 8) * 8                          # sublane-aligned tile rows
        padded_batch = math.ceil(batch / tb) * tb
        x_padded = (jnp.pad(x, ((0, padded_batch - batch), (0, 0)))
                    if padded_batch != batch else x)

    grid = (padded_batch // tb,)
    vmem_limit = int(min(32 * 2**20, max(16 * 2**20, 4 * tb * row_bytes)))

    fused = pl.pallas_call(
        functools.partial(_mixq_bits_kernel, dim1=dim1, b1=b1, b2=b2),
        out_shape=jax.ShapeDtypeStruct((padded_batch, out_dim), out_dtype),
        grid=grid,
        in_specs=[pl.BlockSpec((tb, dim), lambda i: (i, 0))],
        out_specs=pl.BlockSpec((tb, out_dim), lambda i: (i, 0)),
        compiler_params=pltpu.CompilerParams(
            dimension_semantics=("parallel",),
            vmem_limit_bytes=vmem_limit),
    )(x_padded)

    fused = fused[:batch]
    if not interleave_bits:
        # Consumer absorbs `_bit_permutation(...)` into its weight columns.
        return fused
    perm = jnp.asarray(_bit_permutation(dim1, dim2, b1, b2))
    return jnp.take(fused, perm, axis=1)


def _reference(x, dim1, b1, b2):
    """Pure-numpy replica of the PyTorch forward (for verification)."""
    x = np.asarray(x)

    def q(xp, B):
        v = np.round(xp).astype(np.int64) & 0xFF
        shifts = np.arange(B - 1, -1, -1)
        bits = ((v[..., None] >> shifts) & 1).astype(np.float32)
        return bits.reshape(xp.shape[0], xp.shape[1] * B)

    return np.concatenate([q(x[:, :dim1], b1), q(x[:, dim1:], b2)], axis=-1)


if __name__ == "__main__":
    key = jax.random.PRNGKey(0)
    cases = [
        # (batch, dim, mixq_factor, n_q_bit, max_rows_per_tile)
        (8, 256, 0.5, 3, 1024),   # lane-aligned halves (dim1 = dim2 = 128)
        (4, 8, 0.5, 3, 1024),     # tiny / unaligned halves (masked-store path)
        (20, 256, 0.5, 4, 8),     # multi-step grid + batch-padding path
    ]
    for (batch, dim, mixq_factor, n_q_bit, mrpt) in cases:
        dim1 = round(dim * mixq_factor)
        dim2 = dim - dim1
        b1, b2 = n_q_bit - 1, n_q_bit

        key, sub = jax.random.split(key)
        # Non-negative inputs (matches the intended use of the uint8 cast).
        x = jax.random.uniform(sub, (batch, dim), dtype=jnp.float32,
                               minval=0.0, maxval=float(2 ** n_q_bit) - 0.6)

        out = mix_quantization_forward(x, dim1=dim1, b1=b1, b2=b2,
                                       max_rows_per_tile=mrpt)
        out = jax.block_until_ready(out)

        assert out.shape == (batch, dim1 * b1 + dim2 * b2), out.shape
        np.testing.assert_array_equal(np.asarray(out),
                                      _reference(x, dim1, b1, b2))

    print("KERNEL_OK")
</pallas_src>

<mosaic_0001>
module attributes {stable_mosaic.version = 11 : i64} {
  func.func @_mixq_bits_kernel(%arg0: i32, %arg1: memref<8x256xf32, #tpu.memory_space<vmem>>, %arg2: memref<8x640xf32, #tpu.memory_space<vmem>>) attributes {dimension_semantics = [#tpu.dimension_semantics<parallel>], iteration_bounds = array<i64: 1>, scalar_prefetch = 0 : i64, scratch_operands = 0 : i64, tpu.core_type = #tpu.core_type<tc>, window_params = [{transform_indices = @transform_0, window_bounds = array<i64: 8, 256>}, {transform_indices = @transform_1, window_bounds = array<i64: 8, 640>}]} {
    %c0 = arith.constant 0 : index
    %c0_0 = arith.constant 0 : index
    %0 = vector.load %arg1[%c0, %c0_0] : memref<8x256xf32, #tpu.memory_space<vmem>>, vector<8x128xf32>
    %1 = math.roundeven %0 : vector<8x128xf32>
    %2 = arith.fptosi %1 : vector<8x128xf32> to vector<8x128xi32>
    %c255_i32 = arith.constant 255 : i32
    %3 = vector.broadcast %c255_i32 : i32 to vector<8x128xi32>
    %4 = arith.andi %2, %3 : vector<8x128xi32>
    %c1_i32 = arith.constant 1 : i32
    %5 = vector.broadcast %c1_i32 : i32 to vector<8x128xi32>
    %6 = arith.shrsi %4, %5 : vector<8x128xi32>
    %c1_i32_1 = arith.constant 1 : i32
    %7 = vector.broadcast %c1_i32_1 : i32 to vector<8x128xi32>
    %8 = arith.andi %6, %7 : vector<8x128xi32>
    %9 = arith.sitofp %8 : vector<8x128xi32> to vector<8x128xf32>
    %c0_2 = arith.constant 0 : index
    %c0_3 = arith.constant 0 : index
    %10 = vector.load %arg2[%c0_2, %c0_3] : memref<8x640xf32, #tpu.memory_space<vmem>>, vector<8x128xf32>
    tpu.vector_store %arg2[%c0_2, %c0_3], %9 {strides = array<i32>} : memref<8x640xf32, #tpu.memory_space<vmem>>, vector<8x128xf32>,
    %c0_i32 = arith.constant 0 : i32
    %11 = vector.broadcast %c0_i32 : i32 to vector<8x128xi32>
    %12 = arith.shrsi %4, %11 : vector<8x128xi32>
    %c1_i32_4 = arith.constant 1 : i32
    %13 = vector.broadcast %c1_i32_4 : i32 to vector<8x128xi32>
    %14 = arith.andi %12, %13 : vector<8x128xi32>
    %15 = arith.sitofp %14 : vector<8x128xi32> to vector<8x128xf32>
    %c0_5 = arith.constant 0 : index
    %c128 = arith.constant 128 : index
    %16 = vector.load %arg2[%c0_5, %c128] : memref<8x640xf32, #tpu.memory_space<vmem>>, vector<8x128xf32>
    tpu.vector_store %arg2[%c0_5, %c128], %15 {strides = array<i32>} : memref<8x640xf32, #tpu.memory_space<vmem>>, vector<8x128xf32>,
    %c0_6 = arith.constant 0 : index
    %c128_7 = arith.constant 128 : index
    %17 = vector.load %arg1[%c0_6, %c128_7] : memref<8x256xf32, #tpu.memory_space<vmem>>, vector<8x128xf32>
    %18 = math.roundeven %17 : vector<8x128xf32>
    %19 = arith.fptosi %18 : vector<8x128xf32> to vector<8x128xi32>
    %c255_i32_8 = arith.constant 255 : i32
    %20 = vector.broadcast %c255_i32_8 : i32 to vector<8x128xi32>
    %21 = arith.andi %19, %20 : vector<8x128xi32>
    %c2_i32 = arith.constant 2 : i32
    %22 = vector.broadcast %c2_i32 : i32 to vector<8x128xi32>
    %23 = arith.shrsi %21, %22 : vector<8x128xi32>
    %c1_i32_9 = arith.constant 1 : i32
    %24 = vector.broadcast %c1_i32_9 : i32 to vector<8x128xi32>
    %25 = arith.andi %23, %24 : vector<8x128xi32>
    %26 = arith.sitofp %25 : vector<8x128xi32> to vector<8x128xf32>
    %c0_10 = arith.constant 0 : index
    %c256 = arith.constant 256 : index
    %27 = vector.load %arg2[%c0_10, %c256] : memref<8x640xf32, #tpu.memory_space<vmem>>, vector<8x128xf32>
    tpu.vector_store %arg2[%c0_10, %c256], %26 {strides = array<i32>} : memref<8x640xf32, #tpu.memory_space<vmem>>, vector<8x128xf32>,
    %c1_i32_11 = arith.constant 1 : i32
    %28 = vector.broadcast %c1_i32_11 : i32 to vector<8x128xi32>
    %29 = arith.shrsi %21, %28 : vector<8x128xi32>
    %c1_i32_12 = arith.constant 1 : i32
    %30 = vector.broadcast %c1_i32_12 : i32 to vector<8x128xi32>
    %31 = arith.andi %29, %30 : vector<8x128xi32>
    %32 = arith.sitofp %31 : vector<8x128xi32> to vector<8x128xf32>
    %c0_13 = arith.constant 0 : index
    %c384 = arith.constant 384 : index
    %33 = vector.load %arg2[%c0_13, %c384] : memref<8x640xf32, #tpu.memory_space<vmem>>, vector<8x128xf32>
    tpu.vector_store %arg2[%c0_13, %c384], %32 {strides = array<i32>} : memref<8x640xf32, #tpu.memory_space<vmem>>, vector<8x128xf32>,
    %c0_i32_14 = arith.constant 0 : i32
    %34 = vector.broadcast %c0_i32_14 : i32 to vector<8x128xi32>
    %35 = arith.shrsi %21, %34 : vector<8x128xi32>
    %c1_i32_15 = arith.constant 1 : i32
    %36 = vector.broadcast %c1_i32_15 : i32 to vector<8x128xi32>
    %37 = arith.andi %35, %36 : vector<8x128xi32>
    %38 = arith.sitofp %37 : vector<8x128xi32> to vector<8x128xf32>
    %c0_16 = arith.constant 0 : index
    %c512 = arith.constant 512 : index
    %39 = vector.load %arg2[%c0_16, %c512] : memref<8x640xf32, #tpu.memory_space<vmem>>, vector<8x128xf32>
    tpu.vector_store %arg2[%c0_16, %c512], %38 {strides = array<i32>} : memref<8x640xf32, #tpu.memory_space<vmem>>, vector<8x128xf32>,
    return
  }
  func.func @transform_0(%arg0: i32) -> (i32, i32) {
    %c0_i32 = arith.constant 0 : i32
    %c0_i32_0 = arith.constant 0 : i32
    return %arg0, %c0_i32 : i32, i32
  }
  func.func @transform_1(%arg0: i32) -> (i32, i32) {
    %c0_i32 = arith.constant 0 : i32
    %c0_i32_0 = arith.constant 0 : i32
    return %arg0, %c0_i32 : i32, i32
  }
}

</mosaic_0001>

<llo_original>
// kernel: tpu_custom_call.1
$region0: #{tpu_custom_call.1}
  #allocation0 [shape = 'u32[]', space=smem, size = 0x4, offset = 0x4, fixed_abs, tag = 'smem constant byte address 0x4 - core index']
  #allocation1 [shape = 'u32[144,128]{1,0:T(1,128)}', space=vmem, size = 0x12000, scoped, tag = 'internal scratch']
  %s0 = inlined_call_operand.hbm [shape: f32[8,256], index: 0, kind: input, shape index: {}]
  %s1 = inlined_call_operand.hbm [shape: f32[8,640], index: 1, kind: output, shape index: {}]
  %s2 = sld [smem:[#allocation0]]
  $region18: #{tpu_custom_call.1} parent=0
    _
  %s4 = ssub.s32 1, %s2
  %s5 = scalar_select 0, %s4, %s2
  $region1: #{tpu_custom_call.1} parent=0
    #allocation2 [shape = 'u8[8192]{0}', space=vmem, size = 0x2000, scoped, tag = 'input window, operand 0, single buffered']
    #allocation3 [shape = 's32[1]{0}', space=sflag, size = 0x4, scoped, tag = 'scoped memory for tpu_custom_call.1']
    #allocation4 [shape = 's32[1]{0}', space=sflag, size = 0x4, scoped, tag = 'scoped memory for tpu_custom_call.1']
    #allocation5 [shape = 'u8[20480]{0}', space=vmem, size = 0x5000, scoped, tag = 'output window, operand 0, single buffered']
    %6 = vsyncpa [#allocation3], 0
    %7 = vsyncpa [#allocation4], 0
    // Predicated region
    $region2: #{tpu_custom_call.1} parent=1 // pred_check
      _
    $region3: #{tpu_custom_call.1} parent=1 // pred_check_branch
      %9 = sbr.rel (0) target = $region5
    $region4: #{tpu_custom_call.1} parent=1 // pred_region
      %s11 = ssub.s32 256, 256
      %12 = vsyncadd [#allocation3], %s11
      %s14 = sshll.u32 [#allocation2], 4
      %s15 = int_to_ptr.vmem [resolvable:$true] %s14
      %17 = dma.hbm_to_vmem [thread:$0]  %s0, 256, %s15, [#allocation3]
    $region5: #{tpu_custom_call.1} parent=1 // pred_fallthru
      _
    // Predicated region
    $region6: #{tpu_custom_call.1} parent=1 // pred_check
      _
    $region7: #{tpu_custom_call.1} parent=1 // pred_check_branch
      %19 = sbr.rel (0) target = $region9
    $region8: #{tpu_custom_call.1} parent=1 // pred_region
      %20 = dma.done [#allocation3], 256
    $region9: #{tpu_custom_call.1} parent=1 // pred_fallthru
      _
    %v21 = vld [vmem:[#allocation2] sm:$0xff]
    %v22 = vcvt.f32.s32.ties.to.even %v21
    %v23 = vand.u32 %v22, 255
    %v24 = vshra.s32 %v23, 1
    %v25 = vand.u32 %v24, 1
    %v26 = vcvt.s32.f32 %v25
    %27 = vst [vmem:[#allocation5] sm:$0xff] %v26
    %v28 = vand.u32 %v23, 1
    %v29 = vcvt.s32.f32 %v28
    %30 = vst [vmem:[#allocation5 + $0x8] sm:$0xff] %v29
    %v31 = vld [vmem:[#allocation2 + $0x8] sm:$0xff]
    %v32 = vcvt.f32.s32.ties.to.even %v31
    %v33 = vand.u32 %v32, 255
    %v34 = vshra.s32 %v33, 2
    %v35 = vand.u32 %v34, 1
    %v36 = vcvt.s32.f32 %v35
    %37 = vst [vmem:[#allocation5 + $0x10] sm:$0xff] %v36
    %v38 = vshra.s32 %v33, 1
    %v39 = vand.u32 %v38, 1
    %v40 = vcvt.s32.f32 %v39
    %41 = vst [vmem:[#allocation5 + $0x18] sm:$0xff] %v40
    %v42 = vand.u32 %v33, 1
    %v43 = vcvt.s32.f32 %v42
    %44 = vst [vmem:[#allocation5 + $0x20] sm:$0xff] %v43
    // Predicated region
    $region10: #{tpu_custom_call.1} parent=1 // pred_check
      _
    $region11: #{tpu_custom_call.1} parent=1 // pred_check_branch
      %46 = sbr.rel (0) target = $region13
    $region12: #{tpu_custom_call.1} parent=1 // pred_region
      %s48 = ssub.s32 640, 640
      %49 = vsyncadd [#allocation4], %s48
      %s51 = sshll.u32 [#allocation5], 4
      %s52 = int_to_ptr.vmem [resolvable:$true] %s51
      %54 = dma.vmem_to_hbm [thread:$0]  %s52, 640, %s1, [#allocation4]
    $region13: #{tpu_custom_call.1} parent=1 // pred_fallthru
      _
    // Predicated region
    $region14: #{tpu_custom_call.1} parent=1 // pred_check
      _
    $region15: #{tpu_custom_call.1} parent=1 // pred_check_branch
      %56 = sbr.rel (0) target = $region17
    $region16: #{tpu_custom_call.1} parent=1 // pred_region
      %57 = dma.done [#allocation4], 640
    $region17: #{tpu_custom_call.1} parent=1 // pred_fallthru
      _
    %58 = vsyncpa [#allocation3], 1
    %59 = vsyncpa [#allocation4], 1

</llo_original>
